<compile_context>
chip_gen: v6e
topology: v6e:2x2x1
jax: 0.10.0
libtpu: 0.0.40
codegen_flags: <defaults>
</compile_context>

<pallas_src>
import functools

import jax
import jax.numpy as jnp
from jax.experimental import pallas as pl
from jax.experimental.pallas import tpu as pltpu

HIDDEN = 100          # logical hidden size (nn.Linear(input_dim, 100))
NEG_SLOPE = 0.01      # torch.nn.functional.leaky_relu default
NEG_MASK = -1e30      # bias for padded output columns -> exp underflows to 0
                      # (safe in f32: no overflow/NaN; real logits never get
                      #  anywhere near this magnitude)
TM_MAX = 512          # target batch-tile rows (mem-bound sweet spot)
VMEM_BUDGET = 20 * 1024 * 1024   # bytes for the double-buffered pipeline
VMEM_LIMIT = 32 * 1024 * 1024    # explicit scoped-VMEM limit (safe on all chips)


def _round_up(n, m):
    return ((n + m - 1) // m) * m


def _pick_tm(B, D_in, hid_pad, out_pad):
    """Adaptive batch-tile size.

    Big enough to amortize the ~0.35 us per-grid-step overhead, small enough
    that (double-buffered x tile + out tile + resident weight blocks) fits the
    VMEM budget on v7x (64 MiB physical), and with enough steps that the
    'parallel' axis shards across v7x's two TensorCores. Rows are rounded to
    8 (sublane) so batch-padding waste is at most 7 rows.
    """
    fixed = 2 * 4 * (D_in * hid_pad + hid_pad + hid_pad * out_pad + out_pad)
    per_row = 2 * 4 * (D_in + out_pad)      # x tile + out tile, double-buffered
    cap = max(8, ((VMEM_BUDGET - fixed) // per_row) // 8 * 8)
    tm_max = min(TM_MAX, cap)
    n_steps = -(-B // tm_max)               # cdiv: steps forced by the VMEM cap
    if B > 256 and n_steps < 2:
        n_steps = 2                         # feed both v7x TensorCores
    tm = _round_up(-(-B // n_steps), 8)
    return min(tm, tm_max)


def mlp_kernel(x_ref, w1_ref, b1_ref, w2_ref, b2_ref, o_ref):
    # fc1: [TM, D_in] @ [D_in, H_pad] + [1, H_pad]
    h = jnp.dot(x_ref[...], w1_ref[...], preferred_element_type=jnp.float32)
    h = h + b1_ref[...]
    # leaky_relu (padded hidden cols are exactly 0 -> stay 0)
    h = jnp.where(h > 0, h, NEG_SLOPE * h)
    # fc2: [TM, H_pad] @ [H_pad, OUT_pad] + [1, OUT_pad]
    # padded output cols carry bias -1e30 -> exp() == 0 in the softmax sum
    logits = jnp.dot(h, w2_ref[...], preferred_element_type=jnp.float32)
    logits = logits + b2_ref[...]
    # log_softmax over the feature axis
    m = jnp.max(logits, axis=1, keepdims=True)
    shifted = logits - m
    lse = jnp.log(jnp.sum(jnp.exp(shifted), axis=1, keepdims=True))
    o_ref[...] = (shifted - lse).astype(o_ref.dtype)


def pad_params(w1, b1, w2, b2):
    """Lane-align parameters ONCE (outside the per-call path).

    Returns padded (w1p, b1p, w2p, b2p) to be passed directly to nn_forward.
    """
    D_in, H = w1.shape
    D_out = w2.shape[1]
    hid_pad = _round_up(H, 128)
    out_pad = _round_up(D_out, 128)
    b1 = b1.reshape(1, H)
    b2 = b2.reshape(1, D_out)
    w1p = jnp.pad(w1, ((0, 0), (0, hid_pad - H)))
    b1p = jnp.pad(b1, ((0, 0), (0, hid_pad - H)))
    w2p = jnp.pad(w2, ((0, hid_pad - H), (0, out_pad - D_out)))
    b2p = jnp.pad(b2, ((0, 0), (0, out_pad - D_out)), constant_values=NEG_MASK)
    return w1p, b1p, w2p, b2p


@functools.partial(jax.jit, static_argnames=("d_out",))
def nn_forward(x, w1p, b1p, w2p, b2p, *, d_out):
    """Forward pass. Expects PRE-PADDED params from pad_params()."""
    B, D_in = x.shape
    hid_pad = w1p.shape[1]
    out_pad = w2p.shape[1]

    # ---- adaptive batch tiling ----
    TM = _pick_tm(B, D_in, hid_pad, out_pad)
    B_pad = _round_up(B, TM)
    if B_pad != B:
        x = jnp.pad(x, ((0, B_pad - B), (0, 0)))

    out = pl.pallas_call(
        mlp_kernel,
        out_shape=jax.ShapeDtypeStruct((B_pad, out_pad), jnp.float32),
        grid=(B_pad // TM,),
        in_specs=[
            pl.BlockSpec((TM, D_in), lambda i: (i, 0)),            # x tile
            pl.BlockSpec((D_in, hid_pad), lambda i: (0, 0)),       # w1 (whole)
            pl.BlockSpec((1, hid_pad), lambda i: (0, 0)),          # b1
            pl.BlockSpec((hid_pad, out_pad), lambda i: (0, 0)),    # w2 (whole)
            pl.BlockSpec((1, out_pad), lambda i: (0, 0)),          # b2
        ],
        out_specs=pl.BlockSpec((TM, out_pad), lambda i: (i, 0)),
        compiler_params=pltpu.CompilerParams(
            dimension_semantics=("parallel",),
            vmem_limit_bytes=VMEM_LIMIT,
        ),
    )(x, w1p, b1p, w2p, b2p)

    # slice back to the logical output
    return out[:B, :d_out]


def init_params(key, input_dim, output_dim):
    """Deterministic init mimicking torch.nn.Linear (uniform +-1/sqrt(fan_in))."""
    k1, k2, k3, k4 = jax.random.split(key, 4)
    bound1 = 1.0 / jnp.sqrt(jnp.float32(input_dim))
    bound2 = 1.0 / jnp.sqrt(jnp.float32(HIDDEN))
    w1 = jax.random.uniform(k1, (input_dim, HIDDEN), jnp.float32, -bound1, bound1)
    b1 = jax.random.uniform(k2, (1, HIDDEN), jnp.float32, -bound1, bound1)
    w2 = jax.random.uniform(k3, (HIDDEN, output_dim), jnp.float32, -bound2, bound2)
    b2 = jax.random.uniform(k4, (1, output_dim), jnp.float32, -bound2, bound2)
    return w1, b1, w2, b2


if __name__ == "__main__":
    key = jax.random.PRNGKey(0)
    kx, kp = jax.random.split(key)

    batch, input_dim, output_dim = 8, 32, 16
    x = jax.random.normal(kx, (batch, input_dim), jnp.float32)
    w1, b1, w2, b2 = init_params(kp, input_dim, output_dim)

    # Pad parameters ONCE (hoisted out of the forward path).
    w1p, b1p, w2p, b2p = pad_params(w1, b1, w2, b2)
    w1p, b1p, w2p, b2p = jax.block_until_ready((w1p, b1p, w2p, b2p))

    out = nn_forward(x, w1p, b1p, w2p, b2p, d_out=output_dim)
    jax.block_until_ready(out)
    assert out.shape == (batch, output_dim)

    # Sanity check against pure-JAX reference (unpadded math).
    h_ref = x @ w1 + b1
    h_ref = jnp.where(h_ref > 0, h_ref, NEG_SLOPE * h_ref)
    logits_ref = h_ref @ w2 + b2
    ref = jax.nn.log_softmax(logits_ref, axis=1)
    assert jnp.allclose(out, ref, atol=1e-5, rtol=1e-5)

    # Exercise the multi-step / ragged-batch path too (B > 256 -> >=2 grid steps).
    xb = jax.random.normal(kx, (300, input_dim), jnp.float32)
    outb = nn_forward(xb, w1p, b1p, w2p, b2p, d_out=output_dim)
    jax.block_until_ready(outb)
    hb = xb @ w1 + b1
    hb = jnp.where(hb > 0, hb, NEG_SLOPE * hb)
    refb = jax.nn.log_softmax(hb @ w2 + b2, axis=1)
    assert outb.shape == (300, output_dim)
    assert jnp.allclose(outb, refb, atol=1e-5, rtol=1e-5)

    print("KERNEL_OK")
</pallas_src>

<mosaic_0001>
module attributes {stable_mosaic.version = 11 : i64} {
  func.func @mlp_kernel(%arg0: i32, %arg1: memref<8x32xf32, #tpu.memory_space<vmem>>, %arg2: memref<32x128xf32, #tpu.memory_space<vmem>>, %arg3: memref<1x128xf32, #tpu.memory_space<vmem>>, %arg4: memref<128x128xf32, #tpu.memory_space<vmem>>, %arg5: memref<1x128xf32, #tpu.memory_space<vmem>>, %arg6: memref<8x128xf32, #tpu.memory_space<vmem>>) attributes {dimension_semantics = [#tpu.dimension_semantics<parallel>], iteration_bounds = array<i64: 1>, scalar_prefetch = 0 : i64, scratch_operands = 0 : i64, tpu.core_type = #tpu.core_type<tc>, window_params = [{transform_indices = @transform_0, window_bounds = array<i64: 8, 32>}, {pipeline_mode = #tpu.pipeline_mode<synchronous>, transform_indices = @transform_1, window_bounds = array<i64: 32, 128>}, {pipeline_mode = #tpu.pipeline_mode<synchronous>, transform_indices = @transform_2, window_bounds = array<i64: 1, 128>}, {pipeline_mode = #tpu.pipeline_mode<synchronous>, transform_indices = @transform_3, window_bounds = array<i64: 128, 128>}, {pipeline_mode = #tpu.pipeline_mode<synchronous>, transform_indices = @transform_4, window_bounds = array<i64: 1, 128>}, {transform_indices = @transform_5, window_bounds = array<i64: 8, 128>}]} {
    %c0 = arith.constant 0 : index
    %c0_0 = arith.constant 0 : index
    %0 = vector.load %arg1[%c0, %c0_0] : memref<8x32xf32, #tpu.memory_space<vmem>>, vector<8x32xf32>
    %c0_1 = arith.constant 0 : index
    %c0_2 = arith.constant 0 : index
    %1 = vector.load %arg2[%c0_1, %c0_2] : memref<32x128xf32, #tpu.memory_space<vmem>>, vector<32x128xf32>
    %cst = arith.constant dense<0.000000e+00> : vector<8x128xf32>
    %2 = tpu.matmul %0, %1, %cst {dimension_numbers = #tpu.dot_dimension_numbers<[1], [0], [0], [1], [0, 0, 1, 1], [], []>} : vector<8x32xf32>, vector<32x128xf32>, vector<8x128xf32> -> vector<8x128xf32>
    %c0_3 = arith.constant 0 : index
    %c0_4 = arith.constant 0 : index
    %3 = vector.load %arg3[%c0_3, %c0_4] : memref<1x128xf32, #tpu.memory_space<vmem>>, vector<1x128xf32>
    %4 = vector.broadcast %3 : vector<1x128xf32> to vector<8x128xf32>
    %5 = arith.addf %2, %4 : vector<8x128xf32>
    %cst_5 = arith.constant 0.000000e+00 : f32
    %6 = vector.broadcast %cst_5 : f32 to vector<8x128xf32>
    %7 = arith.cmpf ogt, %5, %6 : vector<8x128xf32>
    %cst_6 = arith.constant 0.00999999977 : f32
    %8 = vector.broadcast %cst_6 : f32 to vector<8x128xf32>
    %9 = arith.mulf %8, %5 : vector<8x128xf32>
    %10 = arith.select %7, %5, %9 : vector<8x128xi1>, vector<8x128xf32>
    %c0_7 = arith.constant 0 : index
    %c0_8 = arith.constant 0 : index
    %11 = vector.load %arg4[%c0_7, %c0_8] : memref<128x128xf32, #tpu.memory_space<vmem>>, vector<128x128xf32>
    %cst_9 = arith.constant dense<0.000000e+00> : vector<8x128xf32>
    %12 = tpu.matmul %10, %11, %cst_9 {dimension_numbers = #tpu.dot_dimension_numbers<[1], [0], [0], [1], [0, 0, 1, 1], [], []>} : vector<8x128xf32>, vector<128x128xf32>, vector<8x128xf32> -> vector<8x128xf32>
    %c0_10 = arith.constant 0 : index
    %c0_11 = arith.constant 0 : index
    %13 = vector.load %arg5[%c0_10, %c0_11] : memref<1x128xf32, #tpu.memory_space<vmem>>, vector<1x128xf32>
    %14 = vector.broadcast %13 : vector<1x128xf32> to vector<8x128xf32>
    %15 = arith.addf %12, %14 : vector<8x128xf32>
    %cst_12 = arith.constant dense<0xFF800000> : vector<8xf32>
    %16 = vector.multi_reduction <maximumf>, %15, %cst_12 [1] : vector<8x128xf32> to vector<8xf32>
    %17 = vector.shape_cast %16 : vector<8xf32> to vector<8x1xf32>
    %18 = vector.broadcast %17 : vector<8x1xf32> to vector<8x128xf32>
    %19 = arith.subf %15, %18 : vector<8x128xf32>
    %20 = math.exp %19 : vector<8x128xf32>
    %cst_13 = arith.constant dense<0.000000e+00> : vector<8xf32>
    %21 = vector.multi_reduction <add>, %20, %cst_13 [1] : vector<8x128xf32> to vector<8xf32>
    %22 = vector.shape_cast %21 : vector<8xf32> to vector<8x1xf32>
    %23 = math.log %22 : vector<8x1xf32>
    %24 = vector.broadcast %23 : vector<8x1xf32> to vector<8x128xf32>
    %25 = arith.subf %19, %24 : vector<8x128xf32>
    %c0_14 = arith.constant 0 : index
    %c0_15 = arith.constant 0 : index
    %26 = vector.load %arg6[%c0_14, %c0_15] : memref<8x128xf32, #tpu.memory_space<vmem>>, vector<8x128xf32>
    tpu.vector_store %arg6[%c0_14, %c0_15], %25 {strides = array<i32>} : memref<8x128xf32, #tpu.memory_space<vmem>>, vector<8x128xf32>,
    return
  }
  func.func @transform_0(%arg0: i32) -> (i32, i32) {
    %c0_i32 = arith.constant 0 : i32
    %c0_i32_0 = arith.constant 0 : i32
    return %arg0, %c0_i32 : i32, i32
  }
  func.func @transform_1(%arg0: i32) -> (i32, i32) {
    %c0_i32 = arith.constant 0 : i32
    %c0_i32_0 = arith.constant 0 : i32
    %c0_i32_1 = arith.constant 0 : i32
    return %c0_i32, %c0_i32_0 : i32, i32
  }
  func.func @transform_2(%arg0: i32) -> (i32, i32) {
    %c0_i32 = arith.constant 0 : i32
    %c0_i32_0 = arith.constant 0 : i32
    %c0_i32_1 = arith.constant 0 : i32
    return %c0_i32, %c0_i32_0 : i32, i32
  }
  func.func @transform_3(%arg0: i32) -> (i32, i32) {
    %c0_i32 = arith.constant 0 : i32
    %c0_i32_0 = arith.constant 0 : i32
    %c0_i32_1 = arith.constant 0 : i32
    return %c0_i32, %c0_i32_0 : i32, i32
  }
  func.func @transform_4(%arg0: i32) -> (i32, i32) {
    %c0_i32 = arith.constant 0 : i32
    %c0_i32_0 = arith.constant 0 : i32
    %c0_i32_1 = arith.constant 0 : i32
    return %c0_i32, %c0_i32_0 : i32, i32
  }
  func.func @transform_5(%arg0: i32) -> (i32, i32) {
    %c0_i32 = arith.constant 0 : i32
    %c0_i32_0 = arith.constant 0 : i32
    return %arg0, %c0_i32 : i32, i32
  }
}

</mosaic_0001>

<llo_original>
// kernel: nn_forward.1
$region0: #{nn_forward.1}
  #allocation0 [shape = 'u32[]', space=smem, size = 0x4, offset = 0x4, fixed_abs, tag = 'smem constant byte address 0x4 - core index']
  #allocation1 [shape = 'u32[144,128]{1,0:T(1,128)}', space=vmem, size = 0x12000, scoped, tag = 'internal scratch']
  %s0 = inlined_call_operand.hbm [shape: f32[8,32], index: 0, kind: input, shape index: {}]
  %s1 = inlined_call_operand.hbm [shape: f32[32,128], index: 1, kind: input, shape index: {}]
  %s2 = inlined_call_operand.vmem [shape: f32[1,128], index: 2, kind: input, shape index: {}]
  %s3 = inlined_call_operand.hbm [shape: f32[128,128], index: 3, kind: input, shape index: {}]
  %s4 = inlined_call_operand.vmem [shape: f32[1,128], index: 4, kind: input, shape index: {}]
  %s5 = inlined_call_operand.hbm [shape: f32[8,128], index: 5, kind: output, shape index: {}]
  %s6 = sld [smem:[#allocation0]]
  $region42: #{nn_forward.1} parent=0
    _
  %s8 = ssub.s32 1, %s6
  %s9 = scalar_select 0, %s8, %s6
  $region1: #{nn_forward.1} parent=0
    #allocation2 [shape = 'u8[4096]{0}', space=vmem, size = 0x1000, scoped, tag = 'input window, operand 0, single buffered']
    #allocation3 [shape = 's32[1]{0}', space=sflag, size = 0x4, scoped, tag = 'scoped memory for nn_forward.1']
    #allocation4 [shape = 's32[1]{0}', space=sflag, size = 0x4, scoped, tag = 'scoped memory for nn_forward.1']
    #allocation5 [shape = 'u8[16384]{0}', space=vmem, size = 0x4000, scoped, tag = 'input window, operand 1, single buffered']
    #allocation6 [shape = 's32[1]{0}', space=sflag, size = 0x4, scoped, tag = 'scoped memory for nn_forward.1']
    #allocation7 [shape = 'u8[65536]{0}', space=vmem, size = 0x10000, scoped, tag = 'input window, operand 3, single buffered']
    #allocation8 [shape = 'u8[4096]{0}', space=vmem, size = 0x1000, scoped, tag = 'output window, operand 0, single buffered']
    %10 = vsyncpa [#allocation3], 0
    %11 = vsyncpa [#allocation6], 0
    %12 = vsyncpa [#allocation4], 0
    // Predicated region
    $region2: #{nn_forward.1} parent=1 // pred_check
      _
    $region3: #{nn_forward.1} parent=1 // pred_check_branch
      %14 = sbr.rel (0) target = $region5
    $region4: #{nn_forward.1} parent=1 // pred_region
      %s16 = ssub.s32 128, 128
      %17 = vsyncadd [#allocation3], %s16
      %s19 = sshll.u32 [#allocation2], 4
      %s20 = int_to_ptr.vmem [resolvable:$true] %s19
      %22 = dma.hbm_to_vmem [thread:$0]  %s0, 128, %s20, [#allocation3]
    $region5: #{nn_forward.1} parent=1 // pred_fallthru
      _
    // Predicated region
    $region6: #{nn_forward.1} parent=1 // pred_check
      _
    $region7: #{nn_forward.1} parent=1 // pred_check_branch
      %24 = sbr.rel (0) target = $region9
    $region8: #{nn_forward.1} parent=1 // pred_region
      %s26 = ssub.s32 512, 512
      %27 = vsyncadd [#allocation6], %s26
      %s28 = sshll.u32 [#allocation5], 4
      %s29 = int_to_ptr.vmem [resolvable:$true] %s28
      %34 = dma.hbm_to_vmem [thread:$0]  %s1, 512, %s29, [#allocation6], 128, 128, 8
    $region9: #{nn_forward.1} parent=1 // pred_fallthru
      _
    // Predicated region
    $region10: #{nn_forward.1} parent=1 // pred_check
      _
    $region11: #{nn_forward.1} parent=1 // pred_check_branch
      %36 = sbr.rel (0) target = $region13
    $region12: #{nn_forward.1} parent=1 // pred_region
      _
    $region13: #{nn_forward.1} parent=1 // pred_fallthru
      _
    // Predicated region
    $region14: #{nn_forward.1} parent=1 // pred_check
      _
    $region15: #{nn_forward.1} parent=1 // pred_check_branch
      %38 = sbr.rel (0) target = $region17
    $region16: #{nn_forward.1} parent=1 // pred_region
      %s40 = ssub.s32 2048, 2048
      %41 = vsyncadd [#allocation6], %s40
      %s42 = sshll.u32 [#allocation7], 4
      %s43 = int_to_ptr.vmem [resolvable:$true] %s42
      %48 = dma.hbm_to_vmem [thread:$0]  %s3, 2048, %s43, [#allocation6], 128, 128, 8
    $region17: #{nn_forward.1} parent=1 // pred_fallthru
      _
    // Predicated region
    $region18: #{nn_forward.1} parent=1 // pred_check
      _
    $region19: #{nn_forward.1} parent=1 // pred_check_branch
      %50 = sbr.rel (0) target = $region21
    $region20: #{nn_forward.1} parent=1 // pred_region
      _
    $region21: #{nn_forward.1} parent=1 // pred_fallthru
      _
    // Predicated region
    $region22: #{nn_forward.1} parent=1 // pred_check
      _
    $region23: #{nn_forward.1} parent=1 // pred_check_branch
      %52 = sbr.rel (0) target = $region25
    $region24: #{nn_forward.1} parent=1 // pred_region
      %53 = dma.done [#allocation3], 128
    $region25: #{nn_forward.1} parent=1 // pred_fallthru
      _
    // Predicated region
    $region26: #{nn_forward.1} parent=1 // pred_check
      _
    $region27: #{nn_forward.1} parent=1 // pred_check_branch
      %55 = sbr.rel (0) target = $region29
    $region28: #{nn_forward.1} parent=1 // pred_region
      %56 = dma.done [#allocation6], 512
    $region29: #{nn_forward.1} parent=1 // pred_fallthru
      _
    // Predicated region
    $region30: #{nn_forward.1} parent=1 // pred_check
      _
    $region31: #{nn_forward.1} parent=1 // pred_check_branch
      %58 = sbr.rel (0) target = $region33
    $region32: #{nn_forward.1} parent=1 // pred_region
      %59 = dma.done [#allocation6], 2048
    $region33: #{nn_forward.1} parent=1 // pred_fallthru
      _
    %v60 = vld [vmem:[#allocation2] sm:$0xff]
    %v61 = vld [vmem:[#allocation5] sm:$0xff]
    %v62 = vld [vmem:[#allocation5 + $0x8] sm:$0xff]
    %v63 = vld [vmem:[#allocation5 + $0x10] sm:$0xff]
    %v64 = vld [vmem:[#allocation5 + $0x18] sm:$0xff]
    %v65 = vld [vmem:[%s2] sm:$0x1]
    %v67 = vlaneseq
    %v68 = vshrl.u32 %v67, 7
    %v69 = vsub.s32 0, %v68
    %v70 = vrot.slane %v65, %v69
    %vm72 = vcmask 261120
    %v74 = vsel %vm72, %v60, 0
    %76 = vmatprep.subr.mxu0 0.0
    %77 = vmatpush1.msra.mxu0 0.0
    %78 = vmatprep.subr.mxu0 0.0
    %79 = vmatpush1.msra.mxu0 0.0
    %80 = vmatprep.subr.mxu0 0.0
    %81 = vmatpush1.msra.mxu0 0.0
    %82 = vmatprep.subr.mxu0 0.0
    %83 = vmatpush1.msra.mxu0 0.0
    %84 = vmatprep.subr.mxu0 0.0
    %85 = vmatpush1.msra.mxu0 0.0
    %86 = vmatprep.subr.mxu0 0.0
    %87 = vmatpush1.msra.mxu0 0.0
    %88 = vmatprep.subr.mxu0 0.0
    %89 = vmatpush1.msra.mxu0 0.0
    %90 = vmatprep.subr.mxu0 0.0
    %91 = vmatpush1.msra.mxu0 0.0
    %92 = vmatprep.subr.mxu0 0.0
    %93 = vmatpush1.msra.mxu0 0.0
    %94 = vmatprep.subr.mxu0 0.0
    %95 = vmatpush1.msra.mxu0 0.0
    %96 = vmatprep.subr.mxu0 0.0
    %97 = vmatpush1.msra.mxu0 0.0
    %98 = vmatprep.subr.mxu0 0.0
    %99 = vmatpush1.msra.mxu0 0.0
    %100 = vmatprep.subr.mxu0 0.0
    %101 = vmatpush1.msra.mxu0 %v64
    %102 = vmatprep.subr.mxu0 0.0
    %103 = vmatpush1.msra.mxu0 %v63
    %104 = vmatprep.subr.mxu0 0.0
    %105 = vmatpush1.msra.mxu0 %v62
    %106 = vmatprep.subr.mxu0 0.0
    %107 = vmatpush1.msra.mxu0 %v61
    %108 = vmatprep.subr.mxu0 0.0
    %109 = vmatpush2.msra.mxu0 0.0
    %110 = vmatprep.subr.mxu0 0.0
    %111 = vmatpush2.msra.mxu0 0.0
    %112 = vmatprep.subr.mxu0 0.0
    %113 = vmatpush2.msra.mxu0 0.0
    %114 = vmatprep.subr.mxu0 0.0
    %115 = vmatpush2.msra.mxu0 0.0
    %116 = vmatprep.subr.mxu0 0.0
    %117 = vmatpush2.msra.mxu0 0.0
    %118 = vmatprep.subr.mxu0 0.0
    %119 = vmatpush2.msra.mxu0 0.0
    %120 = vmatprep.subr.mxu0 0.0
    %121 = vmatpush2.msra.mxu0 0.0
    %122 = vmatprep.subr.mxu0 0.0
    %123 = vmatpush2.msra.mxu0 0.0
    %124 = vmatprep.subr.mxu0 0.0
    %125 = vmatpush2.msra.mxu0 0.0
    %126 = vmatprep.subr.mxu0 0.0
    %127 = vmatpush2.msra.mxu0 0.0
    %128 = vmatprep.subr.mxu0 0.0
    %129 = vmatpush2.msra.mxu0 0.0
    %130 = vmatprep.subr.mxu0 0.0
    %131 = vmatpush2.msra.mxu0 0.0
    %132 = vmatprep.subr.mxu0 0.0
    %133 = vmatpush2.msra.mxu0 0.0
    %134 = vmatprep.subr.mxu0 0.0
    %135 = vmatpush2.msra.mxu0 0.0
    %136 = vmatprep.subr.mxu0 0.0
    %137 = vmatpush2.msra.mxu0 0.0
    %138 = vmatprep.subr.mxu0 0.0
    %139 = vmatpush2.msra.mxu0 0.0
    %140 = vmatprep.mubr.f32.mxu0 0.0
    %141 = vmatmul.mubr.f32.gmra.mxu0 %v74
    %v142 = vpop.f32.mrf.mxu0
    %v143 = vadd.f32 %v70, %v142
    %v144 = vpop.f32.mrf.mxu0
    %145 = vdwg.mxu0
    %vm146 = vcmp.gt.f32.partialorder %v143, 0.0
    %v147 = vmul.f32 %v143, 0.01
    %v148 = vsel %vm146, %v143, %v147
    %v149 = vld [vmem:[#allocation7] sm:$0xff]
    %v150 = vld [vmem:[#allocation7 + $0x8] sm:$0xff]
    %v151 = vld [vmem:[#allocation7 + $0x10] sm:$0xff]
    %v152 = vld [vmem:[#allocation7 + $0x18] sm:$0xff]
    %v153 = vld [vmem:[#allocation7 + $0x20] sm:$0xff]
    %v154 = vld [vmem:[#allocation7 + $0x28] sm:$0xff]
    %v155 = vld [vmem:[#allocation7 + $0x30] sm:$0xff]
    %v156 = vld [vmem:[#allocation7 + $0x38] sm:$0xff]
    %v157 = vld [vmem:[#allocation7 + $0x40] sm:$0xff]
    %v158 = vld [vmem:[#allocation7 + $0x48] sm:$0xff]
    %v159 = vld [vmem:[#allocation7 + $0x50] sm:$0xff]
    %v160 = vld [vmem:[#allocation7 + $0x58] sm:$0xff]
    %v161 = vld [vmem:[#allocation7 + $0x60] sm:$0xff]
    %v162 = vld [vmem:[#allocation7 + $0x68] sm:$0xff]
    %v163 = vld [vmem:[#allocation7 + $0x70] sm:$0xff]
    %v164 = vld [vmem:[#allocation7 + $0x78] sm:$0xff]
    %v165 = vld [vmem:[%s4] sm:$0x1]
    %v167 = vlaneseq
    %v168 = vshrl.u32 %v167, 7
    %v169 = vsub.s32 0, %v168
    %v170 = vrot.slane %v165, %v169
    %172 = vmatprep.subr.mxu0 0.0
    %173 = vmatpush1.msra.mxu0 %v164
    %174 = vmatprep.subr.mxu0 0.0
    %175 = vmatpush1.msra.mxu0 %v163
    %176 = vmatprep.subr.mxu0 0.0
    %177 = vmatpush1.msra.mxu0 %v162
    %178 = vmatprep.subr.mxu0 0.0
    %179 = vmatpush1.msra.mxu0 %v161
    %180 = vmatprep.subr.mxu0 0.0
    %181 = vmatpush1.msra.mxu0 %v160
    %182 = vmatprep.subr.mxu0 0.0
    %183 = vmatpush1.msra.mxu0 %v159
    %184 = vmatprep.subr.mxu0 0.0
    %185 = vmatpush1.msra.mxu0 %v158
    %186 = vmatprep.subr.mxu0 0.0
    %187 = vmatpush1.msra.mxu0 %v157
    %188 = vmatprep.subr.mxu0 0.0
    %189 = vmatpush1.msra.mxu0 %v156
    %190 = vmatprep.subr.mxu0 0.0
    %191 = vmatpush1.msra.mxu0 %v155
    %192 = vmatprep.subr.mxu0 0.0
    %193 = vmatpush1.msra.mxu0 %v154
    %194 = vmatprep.subr.mxu0 0.0
    %195 = vmatpush1.msra.mxu0 %v153
    %196 = vmatprep.subr.mxu0 0.0
    %197 = vmatpush1.msra.mxu0 %v152
    %198 = vmatprep.subr.mxu0 0.0
    %199 = vmatpush1.msra.mxu0 %v151
    %200 = vmatprep.subr.mxu0 0.0
    %201 = vmatpush1.msra.mxu0 %v150
    %202 = vmatprep.subr.mxu0 0.0
    %203 = vmatpush1.msra.mxu0 %v149
    %204 = vmatprep.subr.mxu0 0.0
    %205 = vmatpush2.msra.mxu0 0.0
    %206 = vmatprep.subr.mxu0 0.0
    %207 = vmatpush2.msra.mxu0 0.0
    %208 = vmatprep.subr.mxu0 0.0
    %209 = vmatpush2.msra.mxu0 0.0
    %210 = vmatprep.subr.mxu0 0.0
    %211 = vmatpush2.msra.mxu0 0.0
    %212 = vmatprep.subr.mxu0 0.0
    %213 = vmatpush2.msra.mxu0 0.0
    %214 = vmatprep.subr.mxu0 0.0
    %215 = vmatpush2.msra.mxu0 0.0
    %216 = vmatprep.subr.mxu0 0.0
    %217 = vmatpush2.msra.mxu0 0.0
    %218 = vmatprep.subr.mxu0 0.0
    %219 = vmatpush2.msra.mxu0 0.0
    %220 = vmatprep.subr.mxu0 0.0
    %221 = vmatpush2.msra.mxu0 0.0
    %222 = vmatprep.subr.mxu0 0.0
    %223 = vmatpush2.msra.mxu0 0.0
    %224 = vmatprep.subr.mxu0 0.0
    %225 = vmatpush2.msra.mxu0 0.0
    %226 = vmatprep.subr.mxu0 0.0
    %227 = vmatpush2.msra.mxu0 0.0
    %228 = vmatprep.subr.mxu0 0.0
    %229 = vmatpush2.msra.mxu0 0.0
    %230 = vmatprep.subr.mxu0 0.0
    %231 = vmatpush2.msra.mxu0 0.0
    %232 = vmatprep.subr.mxu0 0.0
    %233 = vmatpush2.msra.mxu0 0.0
    %234 = vmatprep.subr.mxu0 0.0
    %235 = vmatpush2.msra.mxu0 0.0
    %236 = vmatprep.mubr.f32.mxu0 0.0
    %237 = vmatmul.mubr.f32.gmra.mxu0 %v148
    %v238 = vpop.f32.mrf.mxu0
    %v239 = vadd.f32 %v170, %v238
    %v240 = vpop.f32.mrf.mxu0
    %241 = vdwg.mxu0
    %242 = vmax.xlane.f32.xlu0 %v239
    %v243 = vpop.xlane.xlu0 %242
    %v244 = vsub.f32 %v239, %v243
    %v245 = vmul.f32 %v244, 1.442695
    %v246 = vpow.pop %v245
    %247 = vadd.xlane.f32.xlu0 %v246
    %v248 = vpop.xlane.xlu0 %247
    %v249 = vlog2.pop %v248
    %v250 = vmul.f32 %v249, 0.6931472
    %v251 = vsub.f32 %v244, %v250
    %252 = vst [vmem:[#allocation8] sm:$0xff] %v251
    // Predicated region
    $region34: #{nn_forward.1} parent=1 // pred_check
      _
    $region35: #{nn_forward.1} parent=1 // pred_check_branch
      %254 = sbr.rel (0) target = $region37
    $region36: #{nn_forward.1} parent=1 // pred_region
      %s256 = ssub.s32 128, 128
      %257 = vsyncadd [#allocation4], %s256
      %s259 = sshll.u32 [#allocation8], 4
      %s260 = int_to_ptr.vmem [resolvable:$true] %s259
      %262 = dma.vmem_to_hbm [thread:$0]  %s260, 128, %s5, [#allocation4]
    $region37: #{nn_forward.1} parent=1 // pred_fallthru
      _
    // Predicated region
    $region38: #{nn_forward.1} parent=1 // pred_check
      _
    $region39: #{nn_forward.1} parent=1 // pred_check_branch
      %264 = sbr.rel (0) target = $region41
    $region40: #{nn_forward.1} parent=1 // pred_region
      %265 = dma.done [#allocation4], 128
    $region41: #{nn_forward.1} parent=1 // pred_fallthru
      _
    %266 = vsyncpa [#allocation3], 1
    %267 = vsyncpa [#allocation6], 1
    %268 = vsyncpa [#allocation4], 1

</llo_original>
